<compile_context>
chip_gen: v6e
topology: v6e:2x2x1
jax: 0.10.0
libtpu: 0.0.40
codegen_flags: <defaults>
</compile_context>

<pallas_src>
import functools
from typing import NamedTuple, Any

import jax
import jax.numpy as jnp
from jax.experimental import pallas as pl
from jax.experimental.pallas import tpu as pltpu

_LANE = 128
_SUBLANE = 8
_MAX_TILE_N = 2048                 # review: tile_n ~ 1024-2048
_WEIGHT_BLOCK_BUDGET = 8 << 20     # bytes per (D, tile_n) weight block resident in VMEM


def _round_up(x, m):
    return ((x + m - 1) // m) * m


# ----------------------------- Pallas kernel -----------------------------
def mlp_head_kernel(cls_ref, w_ref, b_ref, out_ref, *, compute_dtype):
    # cls_ref: (tile_b, D) — the BlockSpec already selected the CLS token (token block 0);
    # the other T-1 tokens were never staged through VMEM.
    cls_tok = cls_ref[...].astype(compute_dtype)                       # (tile_b, D)
    # fc1: y = cls @ W^T + b.  W^T is pre-transposed & lane-padded into (D, tile_n) blocks.
    y = jnp.dot(cls_tok, w_ref[...], preferred_element_type=jnp.float32)
    # Bias add / final cast stay f32 (cheap everywhere; v5e VPU has no bf16 VALU).
    out_ref[...] = (y + b_ref[...]).astype(out_ref.dtype)


# ------------------------- hoisted parameter prep -------------------------
class MLPHeadParams(NamedTuple):
    w_t: jax.Array        # (D, C_pad) compute dtype, pre-transposed, zero-padded columns
    b_row: jax.Array      # (1, C_pad) float32
    num_classes: int
    tile_n: int
    compute_dtype: Any


def prepare_mlp_head(fc1_weight, fc1_bias, *, compute_dtype=None, tile_n=None):
    """Once-per-model weight prep (transpose + lane padding).  fc1_weight: (C, D)."""
    C, D = fc1_weight.shape
    if compute_dtype is None:
        # bf16 MXU operands (with f32 accumulation) pay off at production head widths on
        # v5e/v6e/v7x; small dims stay f32 to match nn.Linear numerics exactly.
        compute_dtype = (jnp.bfloat16
                         if (D >= 256 and fc1_weight.dtype == jnp.float32)
                         else fc1_weight.dtype)
    itemsize = jnp.dtype(compute_dtype).itemsize

    C_pad128 = _round_up(C, _LANE)
    if tile_n is None:
        cap = max(_LANE, (_WEIGHT_BLOCK_BUDGET // max(D * itemsize, 1)) // _LANE * _LANE)
        tile_n = min(C_pad128, _MAX_TILE_N, cap)
    tile_n = _round_up(tile_n, _LANE)
    C_pad = _round_up(C, tile_n)

    # Lane-dense, pre-transposed weight (D, C_pad) and f32 bias row (1, C_pad).
    w_t = jnp.zeros((D, C_pad), compute_dtype).at[:, :C].set(
        fc1_weight.T.astype(compute_dtype))
    b_row = jnp.zeros((1, C_pad), jnp.float32).at[:, :C].set(
        fc1_bias.astype(jnp.float32))
    return MLPHeadParams(w_t=w_t, b_row=b_row, num_classes=C, tile_n=tile_n,
                         compute_dtype=compute_dtype)


# ------------------------------- hot path ---------------------------------
def apply_mlp_head(params, latent, *, tile_b=None):
    """latent: (B, T, D).  Returns (B, num_classes) in latent.dtype."""
    B, T, D = latent.shape
    C = params.num_classes
    tile_n = params.tile_n
    D_w, C_pad = params.w_t.shape
    assert D_w == D, "latent embed dim must match fc1 in_features"
    grid_n = C_pad // tile_n

    # Sublane-friendly batch tile; 256-512 amortizes the ~0.35 us/step grid overhead.
    if tile_b is None:
        tile_b = min(512, _round_up(B, _SUBLANE))
        # If there would be a single grid step, split the batch so v7x's second
        # TensorCore (and megacore on v5e/v6e) gets work from the 'parallel' axes.
        if grid_n == 1 and B > _SUBLANE and _round_up(B, tile_b) == tile_b:
            tile_b = max(_SUBLANE, _round_up((tile_b + 1) // 2, _SUBLANE))
    tile_b = max(_SUBLANE, _round_up(tile_b, _SUBLANE))
    B_pad = _round_up(B, tile_b)
    grid = (B_pad // tile_b, grid_n)

    if B_pad == B:
        # CLS-only fetch straight out of (B, T, D): only CLS rows are DMA'd; the squeezed
        # token dim gives the kernel a clean (tile_b, D) ref.  (If profiling shows this
        # strided DMA exposed, add pipeline_mode=pl.Buffered(3) here.)
        head_in = latent
        in_spec = pl.BlockSpec((tile_b, pl.Squeezed(), D), lambda b, n: (b, 0, 0))
    else:
        # Ragged batch: pad ONLY the (B, D) CLS slice (exactly the bytes the kernel reads),
        # never the full (B, T, D) token tensor.
        head_in = jnp.pad(latent[:, 0, :], ((0, B_pad - B), (0, 0)))
        in_spec = pl.BlockSpec((tile_b, D), lambda b, n: (b, 0))

    out_dtype = latent.dtype
    kernel = functools.partial(mlp_head_kernel, compute_dtype=params.compute_dtype)

    # Scoped-VMEM limit sized from the actual buffers (defaults are 16-32 MiB << physical).
    in_isz = jnp.dtype(head_in.dtype).itemsize
    w_isz = jnp.dtype(params.w_t.dtype).itemsize
    out_isz = jnp.dtype(out_dtype).itemsize
    vmem_bytes = (2 * tile_b * D * in_isz              # CLS blocks (double-buffered)
                  + 2 * D * tile_n * w_isz             # weight blocks (worst case 2 bufs)
                  + 2 * tile_n * 4                     # bias row
                  + 2 * tile_b * tile_n * out_isz)     # output blocks
    vmem_limit = min(max(int(vmem_bytes * 1.5) + (4 << 20), 32 << 20), 64 << 20)

    weight_is_grid_invariant = (grid_n == 1)

    def call(single_buffer_resident):
        if single_buffer_resident:
            # Grid-invariant weight/bias: double-buffering them wastes VMEM (biggest win on
            # v7x's 64 MiB VMEM and v5e's small scoped default).
            w_spec = pl.BlockSpec((D, tile_n), lambda b, n: (0, n),
                                  pipeline_mode=pl.Buffered(1))
            b_spec = pl.BlockSpec((1, tile_n), lambda b, n: (0, n),
                                  pipeline_mode=pl.Buffered(1))
        else:
            w_spec = pl.BlockSpec((D, tile_n), lambda b, n: (0, n))
            b_spec = pl.BlockSpec((1, tile_n), lambda b, n: (0, n))
        return pl.pallas_call(
            kernel,
            out_shape=jax.ShapeDtypeStruct((B_pad, C_pad), out_dtype),
            grid_spec=pltpu.PrefetchScalarGridSpec(
                num_scalar_prefetch=0,
                grid=grid,
                in_specs=[in_spec, w_spec, b_spec],
                out_specs=pl.BlockSpec((tile_b, tile_n), lambda b, n: (b, n)),
            ),
            compiler_params=pltpu.CompilerParams(
                dimension_semantics=("parallel", "parallel"),
                vmem_limit_bytes=vmem_limit,
            ),
        )(head_in, params.w_t, params.b_row)

    if weight_is_grid_invariant:
        try:
            out_padded = call(True)
        except Exception:  # pl.Buffered(1) unsupported on this JAX build: still correct.
            out_padded = call(False)
    else:
        out_padded = call(False)

    return out_padded[:B, :C]


def mlp_head(latent, fc1_weight, fc1_bias, *, tile_b=None, tile_n=None, compute_dtype=None):
    """One-shot convenience (re-pays the weight transpose every call; prefer
    prepare_mlp_head() + apply_mlp_head() for repeated forwards)."""
    params = prepare_mlp_head(fc1_weight, fc1_bias,
                              compute_dtype=compute_dtype, tile_n=tile_n)
    return apply_mlp_head(params, latent, tile_b=tile_b)


# --------------------- synthetic base_model stub (glue) -------------------
def synthetic_base_model(x, patch_w, cls_token):
    """x: (B, Cin, H, W) NCHW (PyTorch convention). Returns {'latent': (B, 1+num_patches, D)}."""
    B, Cin, H, W = x.shape
    P = 4  # patch size
    patches = (
        x.reshape(B, Cin, H // P, P, W // P, P)
        .transpose(0, 2, 4, 1, 3, 5)
        .reshape(B, (H // P) * (W // P), Cin * P * P)
    )
    tokens = patches @ patch_w  # (B, num_patches, D)
    cls = jnp.broadcast_to(cls_token.reshape(1, 1, -1), (B, 1, cls_token.shape[-1]))
    latent = jnp.concatenate([cls, tokens], axis=1)
    return {"latent": latent}


# --------------------------------- main -----------------------------------
if __name__ == "__main__":
    key = jax.random.PRNGKey(0)
    k_x, k_pw, k_cls, k_w, k_b = jax.random.split(key, 5)

    # Small shapes consistent with the forward: image -> latent tokens -> CLS -> fc1
    B, Cin, H, W = 2, 4, 16, 16
    P = 4
    D = 32            # base_model.cls_token.shape[-1]
    num_classes = 10

    x = jax.random.normal(k_x, (B, Cin, H, W), dtype=jnp.float32)
    patch_w = jax.random.normal(k_pw, (Cin * P * P, D), dtype=jnp.float32) * 0.02
    cls_token = jax.random.normal(k_cls, (1, 1, D), dtype=jnp.float32)
    # nn.Linear(D, num_classes): weight (num_classes, D), bias (num_classes,)
    fc1_weight = jax.random.normal(k_w, (num_classes, D), dtype=jnp.float32) * 0.02
    fc1_bias = jax.random.normal(k_b, (num_classes,), dtype=jnp.float32) * 0.01

    # base_model (synthetic stub, plain JAX glue)
    latent = synthetic_base_model(x, patch_w, cls_token)["latent"]  # (B, T, D)

    # Hoisted weight prep (model init), then the Pallas MLP head (hot path).
    head = prepare_mlp_head(fc1_weight, fc1_bias)
    out = jax.block_until_ready(apply_mlp_head(head, latent))

    ref = latent[:, 0, :] @ fc1_weight.T + fc1_bias
    assert out.shape == (B, num_classes)
    assert jnp.allclose(out, ref, atol=1e-5, rtol=1e-5), "mismatch vs reference"

    # Tile-aligned batch exercises the zero-copy CLS-only fetch straight from (B, T, D).
    B2 = 8
    x2 = jax.random.normal(jax.random.PRNGKey(1), (B2, Cin, H, W), dtype=jnp.float32)
    latent2 = synthetic_base_model(x2, patch_w, cls_token)["latent"]
    out2 = jax.block_until_ready(apply_mlp_head(head, latent2))
    ref2 = latent2[:, 0, :] @ fc1_weight.T + fc1_bias
    assert out2.shape == (B2, num_classes)
    assert jnp.allclose(out2, ref2, atol=1e-5, rtol=1e-5), "mismatch vs reference (aligned)"

    print("KERNEL_OK")
</pallas_src>

<mosaic_0001>
module attributes {stable_mosaic.version = 11 : i64} {
  func.func @mlp_head_kernel(%arg0: i32, %arg1: i32, %arg2: memref<8x32xf32, #tpu.memory_space<vmem>>, %arg3: memref<32x128xf32, #tpu.memory_space<vmem>>, %arg4: memref<1x128xf32, #tpu.memory_space<vmem>>, %arg5: memref<8x128xf32, #tpu.memory_space<vmem>>) attributes {dimension_semantics = [#tpu.dimension_semantics<parallel>, #tpu.dimension_semantics<parallel>], iteration_bounds = array<i64: 1, 1>, scalar_prefetch = 0 : i64, scratch_operands = 0 : i64, tpu.core_type = #tpu.core_type<tc>, window_params = [{transform_indices = @transform_0, window_bounds = array<i64: 8, 32>}, {pipeline_mode = #tpu.pipeline_mode<synchronous>, transform_indices = @transform_1, window_bounds = array<i64: 32, 128>}, {pipeline_mode = #tpu.pipeline_mode<synchronous>, transform_indices = @transform_2, window_bounds = array<i64: 1, 128>}, {transform_indices = @transform_3, window_bounds = array<i64: 8, 128>}]} {
    %c0 = arith.constant 0 : index
    %c0_0 = arith.constant 0 : index
    %0 = vector.load %arg2[%c0, %c0_0] : memref<8x32xf32, #tpu.memory_space<vmem>>, vector<8x32xf32>
    %c0_1 = arith.constant 0 : index
    %c0_2 = arith.constant 0 : index
    %1 = vector.load %arg3[%c0_1, %c0_2] : memref<32x128xf32, #tpu.memory_space<vmem>>, vector<32x128xf32>
    %cst = arith.constant dense<0.000000e+00> : vector<8x128xf32>
    %2 = tpu.matmul %0, %1, %cst {dimension_numbers = #tpu.dot_dimension_numbers<[1], [0], [0], [1], [0, 0, 1, 1], [], []>} : vector<8x32xf32>, vector<32x128xf32>, vector<8x128xf32> -> vector<8x128xf32>
    %c0_3 = arith.constant 0 : index
    %c0_4 = arith.constant 0 : index
    %3 = vector.load %arg4[%c0_3, %c0_4] : memref<1x128xf32, #tpu.memory_space<vmem>>, vector<1x128xf32>
    %4 = vector.broadcast %3 : vector<1x128xf32> to vector<8x128xf32>
    %5 = arith.addf %2, %4 : vector<8x128xf32>
    %c0_5 = arith.constant 0 : index
    %c0_6 = arith.constant 0 : index
    %6 = vector.load %arg5[%c0_5, %c0_6] : memref<8x128xf32, #tpu.memory_space<vmem>>, vector<8x128xf32>
    tpu.vector_store %arg5[%c0_5, %c0_6], %5 {strides = array<i32>} : memref<8x128xf32, #tpu.memory_space<vmem>>, vector<8x128xf32>,
    return
  }
  func.func @transform_0(%arg0: i32, %arg1: i32) -> (i32, i32) {
    %c0_i32 = arith.constant 0 : i32
    %c0_i32_0 = arith.constant 0 : i32
    return %arg0, %c0_i32 : i32, i32
  }
  func.func @transform_1(%arg0: i32, %arg1: i32) -> (i32, i32) {
    %c0_i32 = arith.constant 0 : i32
    %c0_i32_0 = arith.constant 0 : i32
    return %c0_i32, %arg1 : i32, i32
  }
  func.func @transform_2(%arg0: i32, %arg1: i32) -> (i32, i32) {
    %c0_i32 = arith.constant 0 : i32
    %c0_i32_0 = arith.constant 0 : i32
    return %c0_i32, %arg1 : i32, i32
  }
  func.func @transform_3(%arg0: i32, %arg1: i32) -> (i32, i32) {
    %c0_i32 = arith.constant 0 : i32
    return %arg0, %arg1 : i32, i32
  }
}

module attributes {stable_mosaic.version = 11 : i64} {
  func.func @mlp_head_kernel(%arg0: i32, %arg1: i32, %arg2: memref<8x32xf32, #tpu.memory_space<vmem>>, %arg3: memref<32x128xf32, #tpu.memory_space<vmem>>, %arg4: memref<1x128xf32, #tpu.memory_space<vmem>>, %arg5: memref<8x128xf32, #tpu.memory_space<vmem>>) attributes {dimension_semantics = [#tpu.dimension_semantics<parallel>, #tpu.dimension_semantics<parallel>], iteration_bounds = array<i64: 1, 1>, scalar_prefetch = 0 : i64, scratch_operands = 0 : i64, tpu.core_type = #tpu.core_type<tc>, window_params = [{transform_indices = @transform_0, window_bounds = array<i64: 8, 32>}, {transform_indices = @transform_1, window_bounds = array<i64: 32, 128>}, {transform_indices = @transform_2, window_bounds = array<i64: 1, 128>}, {transform_indices = @transform_3, window_bounds = array<i64: 8, 128>}]} {
    %c0 = arith.constant 0 : index
    %c0_0 = arith.constant 0 : index
    %0 = vector.load %arg2[%c0, %c0_0] : memref<8x32xf32, #tpu.memory_space<vmem>>, vector<8x32xf32>
    %c0_1 = arith.constant 0 : index
    %c0_2 = arith.constant 0 : index
    %1 = vector.load %arg3[%c0_1, %c0_2] : memref<32x128xf32, #tpu.memory_space<vmem>>, vector<32x128xf32>
    %cst = arith.constant dense<0.000000e+00> : vector<8x128xf32>
    %2 = tpu.matmul %0, %1, %cst {dimension_numbers = #tpu.dot_dimension_numbers<[1], [0], [0], [1], [0, 0, 1, 1], [], []>} : vector<8x32xf32>, vector<32x128xf32>, vector<8x128xf32> -> vector<8x128xf32>
    %c0_3 = arith.constant 0 : index
    %c0_4 = arith.constant 0 : index
    %3 = vector.load %arg4[%c0_3, %c0_4] : memref<1x128xf32, #tpu.memory_space<vmem>>, vector<1x128xf32>
    %4 = vector.broadcast %3 : vector<1x128xf32> to vector<8x128xf32>
    %5 = arith.addf %2, %4 : vector<8x128xf32>
    %c0_5 = arith.constant 0 : index
    %c0_6 = arith.constant 0 : index
    %6 = vector.load %arg5[%c0_5, %c0_6] : memref<8x128xf32, #tpu.memory_space<vmem>>, vector<8x128xf32>
    tpu.vector_store %arg5[%c0_5, %c0_6], %5 {strides = array<i32>} : memref<8x128xf32, #tpu.memory_space<vmem>>, vector<8x128xf32>,
    return
  }
  func.func @transform_0(%arg0: i32, %arg1: i32) -> (i32, i32) {
    %c0_i32 = arith.constant 0 : i32
    %c0_i32_0 = arith.constant 0 : i32
    return %arg0, %c0_i32 : i32, i32
  }
  func.func @transform_1(%arg0: i32, %arg1: i32) -> (i32, i32) {
    %c0_i32 = arith.constant 0 : i32
    %c0_i32_0 = arith.constant 0 : i32
    return %c0_i32, %arg1 : i32, i32
  }
  func.func @transform_2(%arg0: i32, %arg1: i32) -> (i32, i32) {
    %c0_i32 = arith.constant 0 : i32
    %c0_i32_0 = arith.constant 0 : i32
    return %c0_i32, %arg1 : i32, i32
  }
  func.func @transform_3(%arg0: i32, %arg1: i32) -> (i32, i32) {
    %c0_i32 = arith.constant 0 : i32
    return %arg0, %arg1 : i32, i32
  }
}

</mosaic_0001>

<llo_original>
// kernel: tpu_custom_call.1
$region0: #{tpu_custom_call.1}
  #allocation0 [shape = 'u32[]', space=smem, size = 0x4, offset = 0x4, fixed_abs, tag = 'smem constant byte address 0x4 - core index']
  #allocation1 [shape = 'u32[144,128]{1,0:T(1,128)}', space=vmem, size = 0x12000, scoped, tag = 'internal scratch']
  %s0 = inlined_call_operand.hbm [shape: f32[8,32], index: 0, kind: input, shape index: {}]
  %s1 = inlined_call_operand.hbm [shape: f32[32,128], index: 1, kind: input, shape index: {}]
  %s2 = inlined_call_operand.vmem [shape: f32[1,128], index: 2, kind: input, shape index: {}]
  %s3 = inlined_call_operand.hbm [shape: f32[8,128], index: 3, kind: output, shape index: {}]
  %s4 = sld [smem:[#allocation0]]
  $region30: #{tpu_custom_call.1} parent=0
    _
  %s6 = ssub.s32 1, %s4
  %s7 = scalar_select 0, %s6, %s4
  $region1: #{tpu_custom_call.1} parent=0
    #allocation2 [shape = 'u8[4096]{0}', space=vmem, size = 0x1000, scoped, tag = 'input window, operand 0, single buffered']
    #allocation3 [shape = 's32[1]{0}', space=sflag, size = 0x4, scoped, tag = 'scoped memory for tpu_custom_call.1']
    #allocation4 [shape = 's32[1]{0}', space=sflag, size = 0x4, scoped, tag = 'scoped memory for tpu_custom_call.1']
    #allocation5 [shape = 'u8[16384]{0}', space=vmem, size = 0x4000, scoped, tag = 'input window, operand 1, single buffered']
    #allocation6 [shape = 's32[1]{0}', space=sflag, size = 0x4, scoped, tag = 'scoped memory for tpu_custom_call.1']
    #allocation7 [shape = 'u8[4096]{0}', space=vmem, size = 0x1000, scoped, tag = 'output window, operand 0, single buffered']
    %8 = vsyncpa [#allocation3], 0
    %9 = vsyncpa [#allocation6], 0
    %10 = vsyncpa [#allocation4], 0
    // Predicated region
    $region2: #{tpu_custom_call.1} parent=1 // pred_check
      _
    $region3: #{tpu_custom_call.1} parent=1 // pred_check_branch
      %12 = sbr.rel (0) target = $region5
    $region4: #{tpu_custom_call.1} parent=1 // pred_region
      %s14 = ssub.s32 128, 128
      %15 = vsyncadd [#allocation3], %s14
      %s17 = sshll.u32 [#allocation2], 4
      %s18 = int_to_ptr.vmem [resolvable:$true] %s17
      %20 = dma.hbm_to_vmem [thread:$0]  %s0, 128, %s18, [#allocation3]
    $region5: #{tpu_custom_call.1} parent=1 // pred_fallthru
      _
    // Predicated region
    $region6: #{tpu_custom_call.1} parent=1 // pred_check
      _
    $region7: #{tpu_custom_call.1} parent=1 // pred_check_branch
      %22 = sbr.rel (0) target = $region9
    $region8: #{tpu_custom_call.1} parent=1 // pred_region
      %s24 = ssub.s32 512, 512
      %25 = vsyncadd [#allocation6], %s24
      %s26 = sshll.u32 [#allocation5], 4
      %s27 = int_to_ptr.vmem [resolvable:$true] %s26
      %32 = dma.hbm_to_vmem [thread:$0]  %s1, 512, %s27, [#allocation6], 128, 128, 8
    $region9: #{tpu_custom_call.1} parent=1 // pred_fallthru
      _
    // Predicated region
    $region10: #{tpu_custom_call.1} parent=1 // pred_check
      _
    $region11: #{tpu_custom_call.1} parent=1 // pred_check_branch
      %34 = sbr.rel (0) target = $region13
    $region12: #{tpu_custom_call.1} parent=1 // pred_region
      _
    $region13: #{tpu_custom_call.1} parent=1 // pred_fallthru
      _
    // Predicated region
    $region14: #{tpu_custom_call.1} parent=1 // pred_check
      _
    $region15: #{tpu_custom_call.1} parent=1 // pred_check_branch
      %36 = sbr.rel (0) target = $region17
    $region16: #{tpu_custom_call.1} parent=1 // pred_region
      %37 = dma.done [#allocation3], 128
    $region17: #{tpu_custom_call.1} parent=1 // pred_fallthru
      _
    // Predicated region
    $region18: #{tpu_custom_call.1} parent=1 // pred_check
      _
    $region19: #{tpu_custom_call.1} parent=1 // pred_check_branch
      %39 = sbr.rel (0) target = $region21
    $region20: #{tpu_custom_call.1} parent=1 // pred_region
      %40 = dma.done [#allocation6], 512
    $region21: #{tpu_custom_call.1} parent=1 // pred_fallthru
      _
    %v41 = vld [vmem:[#allocation2] sm:$0xff]
    %v42 = vld [vmem:[#allocation5] sm:$0xff]
    %v43 = vld [vmem:[#allocation5 + $0x8] sm:$0xff]
    %v44 = vld [vmem:[#allocation5 + $0x10] sm:$0xff]
    %v45 = vld [vmem:[#allocation5 + $0x18] sm:$0xff]
    %v46 = vld [vmem:[%s2] sm:$0x1]
    %v48 = vlaneseq
    %v49 = vshrl.u32 %v48, 7
    %v50 = vsub.s32 0, %v49
    %v51 = vrot.slane %v46, %v50
    %vm53 = vcmask 261120
    %v55 = vsel %vm53, %v41, 0
    %57 = vmatprep.subr.mxu0 0.0
    %58 = vmatpush1.msra.mxu0 0.0
    %59 = vmatprep.subr.mxu0 0.0
    %60 = vmatpush1.msra.mxu0 0.0
    %61 = vmatprep.subr.mxu0 0.0
    %62 = vmatpush1.msra.mxu0 0.0
    %63 = vmatprep.subr.mxu0 0.0
    %64 = vmatpush1.msra.mxu0 0.0
    %65 = vmatprep.subr.mxu0 0.0
    %66 = vmatpush1.msra.mxu0 0.0
    %67 = vmatprep.subr.mxu0 0.0
    %68 = vmatpush1.msra.mxu0 0.0
    %69 = vmatprep.subr.mxu0 0.0
    %70 = vmatpush1.msra.mxu0 0.0
    %71 = vmatprep.subr.mxu0 0.0
    %72 = vmatpush1.msra.mxu0 0.0
    %73 = vmatprep.subr.mxu0 0.0
    %74 = vmatpush1.msra.mxu0 0.0
    %75 = vmatprep.subr.mxu0 0.0
    %76 = vmatpush1.msra.mxu0 0.0
    %77 = vmatprep.subr.mxu0 0.0
    %78 = vmatpush1.msra.mxu0 0.0
    %79 = vmatprep.subr.mxu0 0.0
    %80 = vmatpush1.msra.mxu0 0.0
    %81 = vmatprep.subr.mxu0 0.0
    %82 = vmatpush1.msra.mxu0 %v45
    %83 = vmatprep.subr.mxu0 0.0
    %84 = vmatpush1.msra.mxu0 %v44
    %85 = vmatprep.subr.mxu0 0.0
    %86 = vmatpush1.msra.mxu0 %v43
    %87 = vmatprep.subr.mxu0 0.0
    %88 = vmatpush1.msra.mxu0 %v42
    %89 = vmatprep.subr.mxu0 0.0
    %90 = vmatpush2.msra.mxu0 0.0
    %91 = vmatprep.subr.mxu0 0.0
    %92 = vmatpush2.msra.mxu0 0.0
    %93 = vmatprep.subr.mxu0 0.0
    %94 = vmatpush2.msra.mxu0 0.0
    %95 = vmatprep.subr.mxu0 0.0
    %96 = vmatpush2.msra.mxu0 0.0
    %97 = vmatprep.subr.mxu0 0.0
    %98 = vmatpush2.msra.mxu0 0.0
    %99 = vmatprep.subr.mxu0 0.0
    %100 = vmatpush2.msra.mxu0 0.0
    %101 = vmatprep.subr.mxu0 0.0
    %102 = vmatpush2.msra.mxu0 0.0
    %103 = vmatprep.subr.mxu0 0.0
    %104 = vmatpush2.msra.mxu0 0.0
    %105 = vmatprep.subr.mxu0 0.0
    %106 = vmatpush2.msra.mxu0 0.0
    %107 = vmatprep.subr.mxu0 0.0
    %108 = vmatpush2.msra.mxu0 0.0
    %109 = vmatprep.subr.mxu0 0.0
    %110 = vmatpush2.msra.mxu0 0.0
    %111 = vmatprep.subr.mxu0 0.0
    %112 = vmatpush2.msra.mxu0 0.0
    %113 = vmatprep.subr.mxu0 0.0
    %114 = vmatpush2.msra.mxu0 0.0
    %115 = vmatprep.subr.mxu0 0.0
    %116 = vmatpush2.msra.mxu0 0.0
    %117 = vmatprep.subr.mxu0 0.0
    %118 = vmatpush2.msra.mxu0 0.0
    %119 = vmatprep.subr.mxu0 0.0
    %120 = vmatpush2.msra.mxu0 0.0
    %121 = vmatprep.mubr.f32.mxu0 0.0
    %122 = vmatmul.mubr.f32.gmra.mxu0 %v55
    %v123 = vpop.f32.mrf.mxu0
    %v124 = vadd.f32 %v51, %v123
    %v125 = vpop.f32.mrf.mxu0
    %126 = vdwg.mxu0
    %127 = vst [vmem:[#allocation7] sm:$0xff] %v124
    // Predicated region
    $region22: #{tpu_custom_call.1} parent=1 // pred_check
      _
    $region23: #{tpu_custom_call.1} parent=1 // pred_check_branch
      %129 = sbr.rel (0) target = $region25
    $region24: #{tpu_custom_call.1} parent=1 // pred_region
      %s131 = ssub.s32 128, 128
      %132 = vsyncadd [#allocation4], %s131
      %s134 = sshll.u32 [#allocation7], 4
      %s135 = int_to_ptr.vmem [resolvable:$true] %s134
      %137 = dma.vmem_to_hbm [thread:$0]  %s135, 128, %s3, [#allocation4]
    $region25: #{tpu_custom_call.1} parent=1 // pred_fallthru
      _
    // Predicated region
    $region26: #{tpu_custom_call.1} parent=1 // pred_check
      _
    $region27: #{tpu_custom_call.1} parent=1 // pred_check_branch
      %139 = sbr.rel (0) target = $region29
    $region28: #{tpu_custom_call.1} parent=1 // pred_region
      %140 = dma.done [#allocation4], 128
    $region29: #{tpu_custom_call.1} parent=1 // pred_fallthru
      _
    %141 = vsyncpa [#allocation3], 1
    %142 = vsyncpa [#allocation6], 1
    %143 = vsyncpa [#allocation4], 1

// kernel: tpu_custom_call.1
$region0: #{tpu_custom_call.1}
  #allocation0 [shape = 'u32[]', space=smem, size = 0x4, offset = 0x4, fixed_abs, tag = 'smem constant byte address 0x4 - core index']
  #allocation1 [shape = 'u32[144,128]{1,0:T(1,128)}', space=vmem, size = 0x12000, scoped, tag = 'internal scratch']
  %s0 = inlined_call_operand.hbm [shape: f32[8,32], index: 0, kind: input, shape index: {}]
  %s1 = inlined_call_operand.hbm [shape: f32[32,128], index: 1, kind: input, shape index: {}]
  %s2 = inlined_call_operand.vmem [shape: f32[1,128], index: 2, kind: input, shape index: {}]
  %s3 = inlined_call_operand.hbm [shape: f32[8,128], index: 3, kind: output, shape index: {}]
  %s4 = sld [smem:[#allocation0]]
  $region30: #{tpu_custom_call.1} parent=0
    _
  %s6 = ssub.s32 1, %s4
  %s7 = scalar_select 0, %s6, %s4
  $region1: #{tpu_custom_call.1} parent=0
    #allocation2 [shape = 'u8[4096]{0}', space=vmem, size = 0x1000, scoped, tag = 'input window, operand 0, single buffered']
    #allocation3 [shape = 's32[1]{0}', space=sflag, size = 0x4, scoped, tag = 'scoped memory for tpu_custom_call.1']
    #allocation4 [shape = 's32[1]{0}', space=sflag, size = 0x4, scoped, tag = 'scoped memory for tpu_custom_call.1']
    #allocation5 [shape = 'u8[16384]{0}', space=vmem, size = 0x4000, scoped, tag = 'input window, operand 1, single buffered']
    #allocation6 [shape = 's32[1]{0}', space=sflag, size = 0x4, scoped, tag = 'scoped memory for tpu_custom_call.1']
    #allocation7 [shape = 'u8[4096]{0}', space=vmem, size = 0x1000, scoped, tag = 'output window, operand 0, single buffered']
    %8 = vsyncpa [#allocation3], 0
    %9 = vsyncpa [#allocation6], 0
    %10 = vsyncpa [#allocation4], 0
    // Predicated region
    $region2: #{tpu_custom_call.1} parent=1 // pred_check
      _
    $region3: #{tpu_custom_call.1} parent=1 // pred_check_branch
      %12 = sbr.rel (0) target = $region5
    $region4: #{tpu_custom_call.1} parent=1 // pred_region
      %s14 = ssub.s32 128, 128
      %15 = vsyncadd [#allocation3], %s14
      %s17 = sshll.u32 [#allocation2], 4
      %s18 = int_to_ptr.vmem [resolvable:$true] %s17
      %20 = dma.hbm_to_vmem [thread:$0]  %s0, 128, %s18, [#allocation3]
    $region5: #{tpu_custom_call.1} parent=1 // pred_fallthru
      _
    // Predicated region
    $region6: #{tpu_custom_call.1} parent=1 // pred_check
      _
    $region7: #{tpu_custom_call.1} parent=1 // pred_check_branch
      %22 = sbr.rel (0) target = $region9
    $region8: #{tpu_custom_call.1} parent=1 // pred_region
      %s24 = ssub.s32 512, 512
      %25 = vsyncadd [#allocation6], %s24
      %s26 = sshll.u32 [#allocation5], 4
      %s27 = int_to_ptr.vmem [resolvable:$true] %s26
      %32 = dma.hbm_to_vmem [thread:$0]  %s1, 512, %s27, [#allocation6], 128, 128, 8
    $region9: #{tpu_custom_call.1} parent=1 // pred_fallthru
      _
    // Predicated region
    $region10: #{tpu_custom_call.1} parent=1 // pred_check
      _
    $region11: #{tpu_custom_call.1} parent=1 // pred_check_branch
      %34 = sbr.rel (0) target = $region13
    $region12: #{tpu_custom_call.1} parent=1 // pred_region
      _
    $region13: #{tpu_custom_call.1} parent=1 // pred_fallthru
      _
    // Predicated region
    $region14: #{tpu_custom_call.1} parent=1 // pred_check
      _
    $region15: #{tpu_custom_call.1} parent=1 // pred_check_branch
      %36 = sbr.rel (0) target = $region17
    $region16: #{tpu_custom_call.1} parent=1 // pred_region
      %37 = dma.done [#allocation3], 128
    $region17: #{tpu_custom_call.1} parent=1 // pred_fallthru
      _
    // Predicated region
    $region18: #{tpu_custom_call.1} parent=1 // pred_check
      _
    $region19: #{tpu_custom_call.1} parent=1 // pred_check_branch
      %39 = sbr.rel (0) target = $region21
    $region20: #{tpu_custom_call.1} parent=1 // pred_region
      %40 = dma.done [#allocation6], 512
    $region21: #{tpu_custom_call.1} parent=1 // pred_fallthru
      _
    %v41 = vld [vmem:[#allocation2] sm:$0xff]
    %v42 = vld [vmem:[#allocation5] sm:$0xff]
    %v43 = vld [vmem:[#allocation5 + $0x8] sm:$0xff]
    %v44 = vld [vmem:[#allocation5 + $0x10] sm:$0xff]
    %v45 = vld [vmem:[#allocation5 + $0x18] sm:$0xff]
    %v46 = vld [vmem:[%s2] sm:$0x1]
    %v48 = vlaneseq
    %v49 = vshrl.u32 %v48, 7
    %v50 = vsub.s32 0, %v49
    %v51 = vrot.slane %v46, %v50
    %vm53 = vcmask 261120
    %v55 = vsel %vm53, %v41, 0
    %57 = vmatprep.subr.mxu0 0.0
    %58 = vmatpush1.msra.mxu0 0.0
    %59 = vmatprep.subr.mxu0 0.0
    %60 = vmatpush1.msra.mxu0 0.0
    %61 = vmatprep.subr.mxu0 0.0
    %62 = vmatpush1.msra.mxu0 0.0
    %63 = vmatprep.subr.mxu0 0.0
    %64 = vmatpush1.msra.mxu0 0.0
    %65 = vmatprep.subr.mxu0 0.0
    %66 = vmatpush1.msra.mxu0 0.0
    %67 = vmatprep.subr.mxu0 0.0
    %68 = vmatpush1.msra.mxu0 0.0
    %69 = vmatprep.subr.mxu0 0.0
    %70 = vmatpush1.msra.mxu0 0.0
    %71 = vmatprep.subr.mxu0 0.0
    %72 = vmatpush1.msra.mxu0 0.0
    %73 = vmatprep.subr.mxu0 0.0
    %74 = vmatpush1.msra.mxu0 0.0
    %75 = vmatprep.subr.mxu0 0.0
    %76 = vmatpush1.msra.mxu0 0.0
    %77 = vmatprep.subr.mxu0 0.0
    %78 = vmatpush1.msra.mxu0 0.0
    %79 = vmatprep.subr.mxu0 0.0
    %80 = vmatpush1.msra.mxu0 0.0
    %81 = vmatprep.subr.mxu0 0.0
    %82 = vmatpush1.msra.mxu0 %v45
    %83 = vmatprep.subr.mxu0 0.0
    %84 = vmatpush1.msra.mxu0 %v44
    %85 = vmatprep.subr.mxu0 0.0
    %86 = vmatpush1.msra.mxu0 %v43
    %87 = vmatprep.subr.mxu0 0.0
    %88 = vmatpush1.msra.mxu0 %v42
    %89 = vmatprep.subr.mxu0 0.0
    %90 = vmatpush2.msra.mxu0 0.0
    %91 = vmatprep.subr.mxu0 0.0
    %92 = vmatpush2.msra.mxu0 0.0
    %93 = vmatprep.subr.mxu0 0.0
    %94 = vmatpush2.msra.mxu0 0.0
    %95 = vmatprep.subr.mxu0 0.0
    %96 = vmatpush2.msra.mxu0 0.0
    %97 = vmatprep.subr.mxu0 0.0
    %98 = vmatpush2.msra.mxu0 0.0
    %99 = vmatprep.subr.mxu0 0.0
    %100 = vmatpush2.msra.mxu0 0.0
    %101 = vmatprep.subr.mxu0 0.0
    %102 = vmatpush2.msra.mxu0 0.0
    %103 = vmatprep.subr.mxu0 0.0
    %104 = vmatpush2.msra.mxu0 0.0
    %105 = vmatprep.subr.mxu0 0.0
    %106 = vmatpush2.msra.mxu0 0.0
    %107 = vmatprep.subr.mxu0 0.0
    %108 = vmatpush2.msra.mxu0 0.0
    %109 = vmatprep.subr.mxu0 0.0
    %110 = vmatpush2.msra.mxu0 0.0
    %111 = vmatprep.subr.mxu0 0.0
    %112 = vmatpush2.msra.mxu0 0.0
    %113 = vmatprep.subr.mxu0 0.0
    %114 = vmatpush2.msra.mxu0 0.0
    %115 = vmatprep.subr.mxu0 0.0
    %116 = vmatpush2.msra.mxu0 0.0
    %117 = vmatprep.subr.mxu0 0.0
    %118 = vmatpush2.msra.mxu0 0.0
    %119 = vmatprep.subr.mxu0 0.0
    %120 = vmatpush2.msra.mxu0 0.0
    %121 = vmatprep.mubr.f32.mxu0 0.0
    %122 = vmatmul.mubr.f32.gmra.mxu0 %v55
    %v123 = vpop.f32.mrf.mxu0
    %v124 = vadd.f32 %v51, %v123
    %v125 = vpop.f32.mrf.mxu0
    %126 = vdwg.mxu0
    %127 = vst [vmem:[#allocation7] sm:$0xff] %v124
    // Predicated region
    $region22: #{tpu_custom_call.1} parent=1 // pred_check
      _
    $region23: #{tpu_custom_call.1} parent=1 // pred_check_branch
      %129 = sbr.rel (0) target = $region25
    $region24: #{tpu_custom_call.1} parent=1 // pred_region
      %s131 = ssub.s32 128, 128
      %132 = vsyncadd [#allocation4], %s131
      %s134 = sshll.u32 [#allocation7], 4
      %s135 = int_to_ptr.vmem [resolvable:$true] %s134
      %137 = dma.vmem_to_hbm [thread:$0]  %s135, 128, %s3, [#allocation4]
    $region25: #{tpu_custom_call.1} parent=1 // pred_fallthru
      _
    // Predicated region
    $region26: #{tpu_custom_call.1} parent=1 // pred_check
      _
    $region27: #{tpu_custom_call.1} parent=1 // pred_check_branch
      %139 = sbr.rel (0) target = $region29
    $region28: #{tpu_custom_call.1} parent=1 // pred_region
      %140 = dma.done [#allocation4], 128
    $region29: #{tpu_custom_call.1} parent=1 // pred_fallthru
      _
    %141 = vsyncpa [#allocation3], 1
    %142 = vsyncpa [#allocation6], 1
    %143 = vsyncpa [#allocation4], 1

</llo_original>
